<compile_context>
chip_gen: v6e
topology: v6e:2x2x1
jax: 0.10.0
libtpu: 0.0.40
codegen_flags: <defaults>
</compile_context>

<pallas_src>
import jax
import jax.numpy as jnp
from jax.experimental import pallas as pl
from jax.experimental.pallas import tpu as pltpu

SMOOTH = 1e-5


def _dice_sums_kernel(x_ref, t_ref, sp_ref, tp_ref, cnt_ref):
    """(1, C, TS, 128) logits + (1, 1, TS, 128) labels -> per-class partials.

    Accumulates over the tile grid axis directly into the resident outputs:
      sp  = sum of softmax probabilities over valid pixels   (per class)
      tp  = probability mass on the target class             (per class)
      cnt = number of valid pixels with that target class    (per class)
    Pixels with label < 0 (wrapper padding / ragged-tile tail) contribute 0.
    """
    @pl.when(pl.program_id(2) == 0)
    def _init():
        sp_ref[...] = jnp.zeros_like(sp_ref)
        tp_ref[...] = jnp.zeros_like(tp_ref)
        cnt_ref[...] = jnp.zeros_like(cnt_ref)

    C = x_ref.shape[1]
    t = t_ref[0, 0]                                   # (TS, 128) int32, -1 = pad
    valid = t >= 0                                    # (TS, 128) bool

    # Per-class full (TS, 128) slabs: all hot-loop work is dense 2-D VALU/EUP;
    # the (small, static) class axis is an unrolled Python loop.
    # Out-of-bounds / padded tail logits are neutralized so exp stays finite.
    xs = [jnp.where(valid, x_ref[0, c].astype(jnp.float32), 0.0) for c in range(C)]

    # Numerically stable softmax over the class axis (elementwise across slabs).
    m = xs[0]
    for c in range(1, C):
        m = jnp.maximum(m, xs[c])
    es = [jnp.exp(xc - m) for xc in xs]
    s = es[0]
    for c in range(1, C):
        s = s + es[c]
    inv = jnp.where(valid, pl.reciprocal(s, approx=False), 0.0)   # masked 1/sum
    # TODO(synk): optional bf16 elementwise path on v6e/v7x (bf16 VPU/EUP).

    one = jnp.ones_like(inv)
    zero = jnp.zeros_like(inv)

    def _colsum(a2d):                                 # (TS,128) -> (1,1)
        # Reduce sublanes first (VALU vreg adds), lanes last (tiny XLU tail).
        col = jnp.sum(a2d, axis=0, keepdims=True)     # (1, 128)
        return jnp.sum(col, axis=1, keepdims=True)    # (1, 1)

    sp_parts, tp_parts, cnt_parts = [], [], []
    for c in range(C):
        pc = es[c] * inv                              # masked prob of class c
        sel = t == c                                  # bool one-hot slice
        sp_parts.append(_colsum(pc))
        tp_parts.append(_colsum(jnp.where(sel, pc, zero)))
        cnt_parts.append(_colsum(jnp.where(sel, one, zero)))

    sp_ref[0, 0] += jnp.concatenate(sp_parts, axis=0)     # (C, 1)
    tp_ref[0, 0] += jnp.concatenate(tp_parts, axis=0)
    cnt_ref[0, 0] += jnp.concatenate(cnt_parts, axis=0)


def _num_tensorcores():
    """Best-effort TensorCores-per-chip (2 on megacore-style chips, else 1)."""
    try:
        info = pltpu.get_tpu_info()
    except Exception:
        return 1
    for name in ("num_tensorcores", "tensorcore_count", "num_cores", "core_count"):
        v = getattr(info, name, None)
        if isinstance(v, int) and v >= 1:
            return min(int(v), 2)
    return 1


def _vmem_limit_bytes():
    try:
        cap = getattr(pltpu.get_tpu_info(), "vmem_capacity_bytes", None)
    except Exception:
        cap = None
    cap = int(cap) if cap else (64 << 20)        # conservative default (v7x per-TC)
    return min(cap * 3 // 4, 96 << 20)           # ~48 MiB on v7x, 96 MiB on v5e/v6e


def dice_loss(preds, targets, size_average=True, reduce=True,
              block_rows=None, groups=None):
    """preds: (N, C, H, W) float logits; targets: (N, 1, H, W) int labels."""
    N, C, H, W = preds.shape
    L = H * W
    T128 = pl.cdiv(L, 128)                       # number of 128-lane pixel columns
    L128 = T128 * 128

    x = jnp.reshape(preds, (N, C, L))            # free reshape, NO transpose
    if not jnp.issubdtype(x.dtype, jnp.floating):
        x = x.astype(jnp.float32)
    # TODO(synk): keep int8/int16 labels end-to-end to shave label HBM traffic.
    t = jnp.reshape(targets, (N, 1, L))
    if t.dtype != jnp.int32:
        t = t.astype(jnp.int32)

    # --- tile rows (TS) per step: sized so the f32 working block is ~2-4 MiB
    # (leaves VMEM headroom for compiler temporaries + double-buffered inputs).
    vmem_limit = _vmem_limit_bytes()
    target_f32_block = min(4 << 20, vmem_limit // 24)
    ts_auto = max(8, target_f32_block // (C * 128 * 4))
    if block_rows is not None:
        ts_req = max(8, (int(block_rows) // 8) * 8)
    else:
        ts_req = max(32, (ts_auto // 32) * 32)

    if T128 <= ts_req:
        TS, n_t = T128, 1                        # one block covers the whole image
    else:
        TS, n_t = ts_req, pl.cdiv(T128, ts_req)

    # --- TensorCore split: G=1 on single-TC chips; 2-way only when the tile
    # count divides evenly (so no logits block is ever fully out of bounds).
    tc = int(groups) if groups is not None else _num_tensorcores()
    G = tc if (tc > 1 and n_t > 1 and n_t % tc == 0) else 1
    n_tg = n_t // G

    # --- padding: preds only to the next 128-multiple (rare for real image
    # sizes); labels are -1-padded to the full grid extent so the ragged grid
    # tail is masked in-kernel instead of copying the big logits tensor.
    if L128 != L:
        x = jnp.pad(x, ((0, 0), (0, 0), (0, L128 - L)))
    x4 = jnp.reshape(x, (N, C, T128, 128))

    Lp = n_t * TS * 128
    if Lp != L:
        t = jnp.pad(t, ((0, 0), (0, 0), (0, Lp - L)), constant_values=-1)
    t4 = jnp.reshape(t, (N, 1, n_t * TS, 128))

    out_sd = jax.ShapeDtypeStruct((N, G, C, 1), jnp.float32)
    out_spec = pl.BlockSpec((1, 1, C, 1), lambda n, g, l: (n, g, 0, 0))

    sp_p, tp_p, cnt_p = pl.pallas_call(
        _dice_sums_kernel,
        out_shape=(out_sd, out_sd, out_sd),
        grid_spec=pltpu.PrefetchScalarGridSpec(
            num_scalar_prefetch=0,
            grid=(N, G, n_tg),
            in_specs=[
                pl.BlockSpec((1, C, TS, 128),
                             lambda n, g, l: (n, 0, g * n_tg + l, 0)),
                pl.BlockSpec((1, 1, TS, 128),
                             lambda n, g, l: (n, 0, g * n_tg + l, 0)),
            ],
            out_specs=(out_spec, out_spec, out_spec),
        ),
        compiler_params=pltpu.CompilerParams(
            dimension_semantics=("parallel", "parallel", "arbitrary"),
            vmem_limit_bytes=vmem_limit,
        ),
    )(x4, t4)

    # Tiny per-class scalar epilogue stays in JAX.
    sp = jnp.sum(sp_p, axis=(0, 1, 3))           # (C,)
    tp = jnp.sum(tp_p, axis=(0, 1, 3))           # (C,)
    cnt = jnp.sum(cnt_p, axis=(0, 1, 3))         # (C,)
    fp = sp - tp
    fn = cnt - tp

    smooth = jnp.float32(SMOOTH)
    alpha = jnp.clip(fp / (fp + fn + smooth), 0.2, 0.8)
    beta = 1.0 - alpha
    dice = tp / (tp + alpha * fp + beta * fn + smooth)
    loss = 1.0 - dice
    if not reduce:
        return loss
    loss = jnp.sum(loss)
    if size_average:
        loss = loss / C
    return loss


def _reference_dice_loss(preds, targets, size_average=True, reduce=True):
    """Plain-JAX replica of the PyTorch forward for verification."""
    N, C, H, W = preds.shape
    P = jax.nn.softmax(preds.astype(jnp.float32), axis=1)
    mask = jax.nn.one_hot(targets[:, 0], C, axis=1, dtype=jnp.float32)
    tp = jnp.sum(P * mask, axis=(0, 2, 3))
    fp = jnp.sum(P * (1.0 - mask), axis=(0, 2, 3))
    fn = jnp.sum((1.0 - P) * mask, axis=(0, 2, 3))
    smooth = jnp.float32(SMOOTH)
    alpha = jnp.clip(fp / (fp + fn + smooth), 0.2, 0.8)
    beta = 1.0 - alpha
    dice = tp / (tp + alpha * fp + beta * fn + smooth)
    loss = 1.0 - dice
    if not reduce:
        return loss
    loss = jnp.sum(loss)
    if size_average:
        loss = loss / C
    return loss


if __name__ == "__main__":
    key = jax.random.PRNGKey(0)

    def run_case(k, N, C, H, W, **kw):
        k1, k2 = jax.random.split(k)
        preds = jax.random.normal(k1, (N, C, H, W), dtype=jnp.float32)
        targets = jax.random.randint(k2, (N, 1, H, W), 0, C, dtype=jnp.int32)
        out = jax.block_until_ready(dice_loss(preds, targets, **kw))
        ref = _reference_dice_loss(preds, targets)
        assert jnp.allclose(out, ref, rtol=1e-5, atol=1e-5), (out, ref)

    k0, k1, k2, k3 = jax.random.split(key, 4)
    # Base case from the module spec (single block per image).
    run_case(k0, N=2, C=4, H=16, W=16)
    # H*W not a multiple of 128: minimal 128-pad of preds + -1 label masking.
    run_case(k1, N=3, C=5, H=7, W=9)
    # Multi-tile accumulation + 2-way group split of the tile axis.
    run_case(k2, N=2, C=3, H=64, W=64, block_rows=8, groups=2)
    # Multi-tile with a ragged (partially out-of-bounds) last block, masked in-kernel.
    run_case(k3, N=2, C=4, H=40, W=64, block_rows=8, groups=1)

    print("KERNEL_OK")
</pallas_src>

<mosaic_0001>
module attributes {stable_mosaic.version = 11 : i64} {
  func.func @_dice_sums_kernel(%arg0: i32, %arg1: i32, %arg2: i32, %arg3: memref<1x4x2x128xf32, #tpu.memory_space<vmem>>, %arg4: memref<1x1x2x128xi32, #tpu.memory_space<vmem>>, %arg5: memref<1x1x4x1xf32, #tpu.memory_space<vmem>>, %arg6: memref<1x1x4x1xf32, #tpu.memory_space<vmem>>, %arg7: memref<1x1x4x1xf32, #tpu.memory_space<vmem>>) attributes {dimension_semantics = [#tpu.dimension_semantics<parallel>, #tpu.dimension_semantics<parallel>, #tpu.dimension_semantics<arbitrary>], iteration_bounds = array<i64: 2, 1, 1>, scalar_prefetch = 0 : i64, scratch_operands = 0 : i64, tpu.core_type = #tpu.core_type<tc>, window_params = [{transform_indices = @transform_0, window_bounds = array<i64: 1, 4, 2, 128>}, {transform_indices = @transform_1, window_bounds = array<i64: 1, 1, 2, 128>}, {transform_indices = @transform_2, window_bounds = array<i64: 1, 1, 4, 1>}, {transform_indices = @transform_3, window_bounds = array<i64: 1, 1, 4, 1>}, {transform_indices = @transform_4, window_bounds = array<i64: 1, 1, 4, 1>}]} {
    %c0_i32 = arith.constant 0 : i32
    %0 = arith.cmpi eq, %arg2, %c0_i32 : i32
    %1 = arith.extui %0 : i1 to i32
    %c0_i32_0 = arith.constant 0 : i32
    %2 = arith.cmpi ne, %1, %c0_i32_0 : i32
    scf.if %2 {
      %cst_73 = arith.constant 0.000000e+00 : f32
      %131 = vector.broadcast %cst_73 : f32 to vector<1x1x4x1xf32>
      %c0_74 = arith.constant 0 : index
      %c0_75 = arith.constant 0 : index
      %c0_76 = arith.constant 0 : index
      %c0_77 = arith.constant 0 : index
      %132 = vector.load %arg5[%c0_74, %c0_75, %c0_76, %c0_77] : memref<1x1x4x1xf32, #tpu.memory_space<vmem>>, vector<1x1x4x1xf32>
      tpu.vector_store %arg5[%c0_74, %c0_75, %c0_76, %c0_77], %131 {strides = array<i32>} : memref<1x1x4x1xf32, #tpu.memory_space<vmem>>, vector<1x1x4x1xf32>,
      %cst_78 = arith.constant 0.000000e+00 : f32
      %133 = vector.broadcast %cst_78 : f32 to vector<1x1x4x1xf32>
      %c0_79 = arith.constant 0 : index
      %c0_80 = arith.constant 0 : index
      %c0_81 = arith.constant 0 : index
      %c0_82 = arith.constant 0 : index
      %134 = vector.load %arg6[%c0_79, %c0_80, %c0_81, %c0_82] : memref<1x1x4x1xf32, #tpu.memory_space<vmem>>, vector<1x1x4x1xf32>
      tpu.vector_store %arg6[%c0_79, %c0_80, %c0_81, %c0_82], %133 {strides = array<i32>} : memref<1x1x4x1xf32, #tpu.memory_space<vmem>>, vector<1x1x4x1xf32>,
      %cst_83 = arith.constant 0.000000e+00 : f32
      %135 = vector.broadcast %cst_83 : f32 to vector<1x1x4x1xf32>
      %c0_84 = arith.constant 0 : index
      %c0_85 = arith.constant 0 : index
      %c0_86 = arith.constant 0 : index
      %c0_87 = arith.constant 0 : index
      %136 = vector.load %arg7[%c0_84, %c0_85, %c0_86, %c0_87] : memref<1x1x4x1xf32, #tpu.memory_space<vmem>>, vector<1x1x4x1xf32>
      tpu.vector_store %arg7[%c0_84, %c0_85, %c0_86, %c0_87], %135 {strides = array<i32>} : memref<1x1x4x1xf32, #tpu.memory_space<vmem>>, vector<1x1x4x1xf32>,
    } else {
    }
    %c0 = arith.constant 0 : index
    %c0_1 = arith.constant 0 : index
    %c0_2 = arith.constant 0 : index
    %c0_3 = arith.constant 0 : index
    %3 = vector.load %arg4[%c0, %c0_1, %c0_2, %c0_3] : memref<1x1x2x128xi32, #tpu.memory_space<vmem>>, vector<1x1x2x128xi32>
    %4 = vector.shape_cast %3 : vector<1x1x2x128xi32> to vector<2x128xi32>
    %c0_i32_4 = arith.constant 0 : i32
    %5 = vector.broadcast %c0_i32_4 : i32 to vector<2x128xi32>
    %6 = arith.cmpi sge, %4, %5 : vector<2x128xi32>
    %c0_5 = arith.constant 0 : index
    %c0_6 = arith.constant 0 : index
    %c0_7 = arith.constant 0 : index
    %c0_8 = arith.constant 0 : index
    %7 = vector.load %arg3[%c0_5, %c0_6, %c0_7, %c0_8] : memref<1x4x2x128xf32, #tpu.memory_space<vmem>>, vector<1x1x2x128xf32>
    %8 = vector.shape_cast %7 : vector<1x1x2x128xf32> to vector<2x128xf32>
    %cst = arith.constant 0.000000e+00 : f32
    %9 = vector.broadcast %cst : f32 to vector<2x128xf32>
    %10 = arith.select %6, %8, %9 : vector<2x128xi1>, vector<2x128xf32>
    %c0_9 = arith.constant 0 : index
    %c1 = arith.constant 1 : index
    %c0_10 = arith.constant 0 : index
    %c0_11 = arith.constant 0 : index
    %11 = vector.load %arg3[%c0_9, %c1, %c0_10, %c0_11] : memref<1x4x2x128xf32, #tpu.memory_space<vmem>>, vector<1x1x2x128xf32>
    %12 = vector.shape_cast %11 : vector<1x1x2x128xf32> to vector<2x128xf32>
    %cst_12 = arith.constant 0.000000e+00 : f32
    %13 = vector.broadcast %cst_12 : f32 to vector<2x128xf32>
    %14 = arith.select %6, %12, %13 : vector<2x128xi1>, vector<2x128xf32>
    %c0_13 = arith.constant 0 : index
    %c2 = arith.constant 2 : index
    %c0_14 = arith.constant 0 : index
    %c0_15 = arith.constant 0 : index
    %15 = vector.load %arg3[%c0_13, %c2, %c0_14, %c0_15] : memref<1x4x2x128xf32, #tpu.memory_space<vmem>>, vector<1x1x2x128xf32>
    %16 = vector.shape_cast %15 : vector<1x1x2x128xf32> to vector<2x128xf32>
    %cst_16 = arith.constant 0.000000e+00 : f32
    %17 = vector.broadcast %cst_16 : f32 to vector<2x128xf32>
    %18 = arith.select %6, %16, %17 : vector<2x128xi1>, vector<2x128xf32>
    %c0_17 = arith.constant 0 : index
    %c3 = arith.constant 3 : index
    %c0_18 = arith.constant 0 : index
    %c0_19 = arith.constant 0 : index
    %19 = vector.load %arg3[%c0_17, %c3, %c0_18, %c0_19] : memref<1x4x2x128xf32, #tpu.memory_space<vmem>>, vector<1x1x2x128xf32>
    %20 = vector.shape_cast %19 : vector<1x1x2x128xf32> to vector<2x128xf32>
    %cst_20 = arith.constant 0.000000e+00 : f32
    %21 = vector.broadcast %cst_20 : f32 to vector<2x128xf32>
    %22 = arith.select %6, %20, %21 : vector<2x128xi1>, vector<2x128xf32>
    %23 = arith.maximumf %10, %14 : vector<2x128xf32>
    %24 = arith.maximumf %23, %18 : vector<2x128xf32>
    %25 = arith.maximumf %24, %22 : vector<2x128xf32>
    %26 = arith.subf %10, %25 : vector<2x128xf32>
    %27 = math.exp %26 : vector<2x128xf32>
    %28 = arith.subf %14, %25 : vector<2x128xf32>
    %29 = math.exp %28 : vector<2x128xf32>
    %30 = arith.subf %18, %25 : vector<2x128xf32>
    %31 = math.exp %30 : vector<2x128xf32>
    %32 = arith.subf %22, %25 : vector<2x128xf32>
    %33 = math.exp %32 : vector<2x128xf32>
    %34 = arith.addf %27, %29 : vector<2x128xf32>
    %35 = arith.addf %34, %31 : vector<2x128xf32>
    %36 = arith.addf %35, %33 : vector<2x128xf32>
    %37 = tpu.reciprocal %36 : vector<2x128xf32> -> vector<2x128xf32>
    %cst_21 = arith.constant 0.000000e+00 : f32
    %38 = vector.broadcast %cst_21 : f32 to vector<2x128xf32>
    %39 = arith.select %6, %37, %38 : vector<2x128xi1>, vector<2x128xf32>
    %cst_22 = arith.constant 1.000000e+00 : f32
    %40 = vector.broadcast %cst_22 : f32 to vector<2x128xf32>
    %cst_23 = arith.constant 0.000000e+00 : f32
    %41 = vector.broadcast %cst_23 : f32 to vector<2x128xf32>
    %42 = arith.mulf %27, %39 : vector<2x128xf32>
    %c0_i32_24 = arith.constant 0 : i32
    %43 = vector.broadcast %c0_i32_24 : i32 to vector<2x128xi32>
    %44 = arith.cmpi eq, %4, %43 : vector<2x128xi32>
    %cst_25 = arith.constant dense<0.000000e+00> : vector<128xf32>
    %45 = vector.multi_reduction <add>, %42, %cst_25 [0] : vector<2x128xf32> to vector<128xf32>
    %46 = vector.shape_cast %45 : vector<128xf32> to vector<1x128xf32>
    %cst_26 = arith.constant dense<0.000000e+00> : vector<1xf32>
    %47 = vector.multi_reduction <add>, %46, %cst_26 [1] : vector<1x128xf32> to vector<1xf32>
    %48 = vector.shape_cast %47 : vector<1xf32> to vector<1x1xf32>
    %49 = arith.select %44, %42, %41 : vector<2x128xi1>, vector<2x128xf32>
    %cst_27 = arith.constant dense<0.000000e+00> : vector<128xf32>
    %50 = vector.multi_reduction <add>, %49, %cst_27 [0] : vector<2x128xf32> to vector<128xf32>
    %51 = vector.shape_cast %50 : vector<128xf32> to vector<1x128xf32>
    %cst_28 = arith.constant dense<0.000000e+00> : vector<1xf32>
    %52 = vector.multi_reduction <add>, %51, %cst_28 [1] : vector<1x128xf32> to vector<1xf32>
    %53 = vector.shape_cast %52 : vector<1xf32> to vector<1x1xf32>
    %54 = arith.select %44, %40, %41 : vector<2x128xi1>, vector<2x128xf32>
    %cst_29 = arith.constant dense<0.000000e+00> : vector<128xf32>
    %55 = vector.multi_reduction <add>, %54, %cst_29 [0] : vector<2x128xf32> to vector<128xf32>
    %56 = vector.shape_cast %55 : vector<128xf32> to vector<1x128xf32>
    %cst_30 = arith.constant dense<0.000000e+00> : vector<1xf32>
    %57 = vector.multi_reduction <add>, %56, %cst_30 [1] : vector<1x128xf32> to vector<1xf32>
    %58 = vector.shape_cast %57 : vector<1xf32> to vector<1x1xf32>
    %59 = arith.mulf %29, %39 : vector<2x128xf32>
    %c1_i32 = arith.constant 1 : i32
    %60 = vector.broadcast %c1_i32 : i32 to vector<2x128xi32>
    %61 = arith.cmpi eq, %4, %60 : vector<2x128xi32>
    %cst_31 = arith.constant dense<0.000000e+00> : vector<128xf32>
    %62 = vector.multi_reduction <add>, %59, %cst_31 [0] : vector<2x128xf32> to vector<128xf32>
    %63 = vector.shape_cast %62 : vector<128xf32> to vector<1x128xf32>
    %cst_32 = arith.constant dense<0.000000e+00> : vector<1xf32>
    %64 = vector.multi_reduction <add>, %63, %cst_32 [1] : vector<1x128xf32> to vector<1xf32>
    %65 = vector.shape_cast %64 : vector<1xf32> to vector<1x1xf32>
    %66 = arith.select %61, %59, %41 : vector<2x128xi1>, vector<2x128xf32>
    %cst_33 = arith.constant dense<0.000000e+00> : vector<128xf32>
    %67 = vector.multi_reduction <add>, %66, %cst_33 [0] : vector<2x128xf32> to vector<128xf32>
    %68 = vector.shape_cast %67 : vector<128xf32> to vector<1x128xf32>
    %cst_34 = arith.constant dense<0.000000e+00> : vector<1xf32>
    %69 = vector.multi_reduction <add>, %68, %cst_34 [1] : vector<1x128xf32> to vector<1xf32>
    %70 = vector.shape_cast %69 : vector<1xf32> to vector<1x1xf32>
    %71 = arith.select %61, %40, %41 : vector<2x128xi1>, vector<2x128xf32>
    %cst_35 = arith.constant dense<0.000000e+00> : vector<128xf32>
    %72 = vector.multi_reduction <add>, %71, %cst_35 [0] : vector<2x128xf32> to vector<128xf32>
    %73 = vector.shape_cast %72 : vector<128xf32> to vector<1x128xf32>
    %cst_36 = arith.constant dense<0.000000e+00> : vector<1xf32>
    %74 = vector.multi_reduction <add>, %73, %cst_36 [1] : vector<1x128xf32> to vector<1xf32>
    %75 = vector.shape_cast %74 : vector<1xf32> to vector<1x1xf32>
    %76 = arith.mulf %31, %39 : vector<2x128xf32>
    %c2_i32 = arith.constant 2 : i32
    %77 = vector.broadcast %c2_i32 : i32 to vector<2x128xi32>
    %78 = arith.cmpi eq, %4, %77 : vector<2x128xi32>
    %cst_37 = arith.constant dense<0.000000e+00> : vector<128xf32>
    %79 = vector.multi_reduction <add>, %76, %cst_37 [0] : vector<2x128xf32> to vector<128xf32>
    %80 = vector.shape_cast %79 : vector<128xf32> to vector<1x128xf32>
    %cst_38 = arith.constant dense<0.000000e+00> : vector<1xf32>
    %81 = vector.multi_reduction <add>, %80, %cst_38 [1] : vector<1x128xf32> to vector<1xf32>
    %82 = vector.shape_cast %81 : vector<1xf32> to vector<1x1xf32>
    %83 = arith.select %78, %76, %41 : vector<2x128xi1>, vector<2x128xf32>
    %cst_39 = arith.constant dense<0.000000e+00> : vector<128xf32>
    %84 = vector.multi_reduction <add>, %83, %cst_39 [0] : vector<2x128xf32> to vector<128xf32>
    %85 = vector.shape_cast %84 : vector<128xf32> to vector<1x128xf32>
    %cst_40 = arith.constant dense<0.000000e+00> : vector<1xf32>
    %86 = vector.multi_reduction <add>, %85, %cst_40 [1] : vector<1x128xf32> to vector<1xf32>
    %87 = vector.shape_cast %86 : vector<1xf32> to vector<1x1xf32>
    %88 = arith.select %78, %40, %41 : vector<2x128xi1>, vector<2x128xf32>
    %cst_41 = arith.constant dense<0.000000e+00> : vector<128xf32>
    %89 = vector.multi_reduction <add>, %88, %cst_41 [0] : vector<2x128xf32> to vector<128xf32>
    %90 = vector.shape_cast %89 : vector<128xf32> to vector<1x128xf32>
    %cst_42 = arith.constant dense<0.000000e+00> : vector<1xf32>
    %91 = vector.multi_reduction <add>, %90, %cst_42 [1] : vector<1x128xf32> to vector<1xf32>
    %92 = vector.shape_cast %91 : vector<1xf32> to vector<1x1xf32>
    %93 = arith.mulf %33, %39 : vector<2x128xf32>
    %c3_i32 = arith.constant 3 : i32
    %94 = vector.broadcast %c3_i32 : i32 to vector<2x128xi32>
    %95 = arith.cmpi eq, %4, %94 : vector<2x128xi32>
    %cst_43 = arith.constant dense<0.000000e+00> : vector<128xf32>
    %96 = vector.multi_reduction <add>, %93, %cst_43 [0] : vector<2x128xf32> to vector<128xf32>
    %97 = vector.shape_cast %96 : vector<128xf32> to vector<1x128xf32>
    %cst_44 = arith.constant dense<0.000000e+00> : vector<1xf32>
    %98 = vector.multi_reduction <add>, %97, %cst_44 [1] : vector<1x128xf32> to vector<1xf32>
    %99 = vector.shape_cast %98 : vector<1xf32> to vector<1x1xf32>
    %100 = arith.select %95, %93, %41 : vector<2x128xi1>, vector<2x128xf32>
    %cst_45 = arith.constant dense<0.000000e+00> : vector<128xf32>
    %101 = vector.multi_reduction <add>, %100, %cst_45 [0] : vector<2x128xf32> to vector<128xf32>
    %102 = vector.shape_cast %101 : vector<128xf32> to vector<1x128xf32>
    %cst_46 = arith.constant dense<0.000000e+00> : vector<1xf32>
    %103 = vector.multi_reduction <add>, %102, %cst_46 [1] : vector<1x128xf32> to vector<1xf32>
    %104 = vector.shape_cast %103 : vector<1xf32> to vector<1x1xf32>
    %105 = arith.select %95, %40, %41 : vector<2x128xi1>, vector<2x128xf32>
    %cst_47 = arith.constant dense<0.000000e+00> : vector<128xf32>
    %106 = vector.multi_reduction <add>, %105, %cst_47 [0] : vector<2x128xf32> to vector<128xf32>
    %107 = vector.shape_cast %106 : vector<128xf32> to vector<1x128xf32>
    %cst_48 = arith.constant dense<0.000000e+00> : vector<1xf32>
    %108 = vector.multi_reduction <add>, %107, %cst_48 [1] : vector<1x128xf32> to vector<1xf32>
    %109 = vector.shape_cast %108 : vector<1xf32> to vector<1x1xf32>
    %c0_49 = arith.constant 0 : index
    %c0_50 = arith.constant 0 : index
    %c0_51 = arith.constant 0 : index
    %c0_52 = arith.constant 0 : index
    %110 = vector.load %arg5[%c0_49, %c0_50, %c0_51, %c0_52] : memref<1x1x4x1xf32, #tpu.memory_space<vmem>>, vector<1x1x4x1xf32>
    %111 = vector.shape_cast %110 : vector<1x1x4x1xf32> to vector<4x1xf32>
    %112 = tpu.concatenate %48, %65, %82, %99 in 0 : vector<1x1xf32>, vector<1x1xf32>, vector<1x1xf32>, vector<1x1xf32> -> vector<4x1xf32>
    %113 = arith.addf %111, %112 : vector<4x1xf32>
    %c0_53 = arith.constant 0 : index
    %c0_54 = arith.constant 0 : index
    %c0_55 = arith.constant 0 : index
    %c0_56 = arith.constant 0 : index
    %114 = vector.load %arg5[%c0_53, %c0_54, %c0_55, %c0_56] : memref<1x1x4x1xf32, #tpu.memory_space<vmem>>, vector<1x1x4x1xf32>
    %115 = vector.shape_cast %114 : vector<1x1x4x1xf32> to vector<4x1xf32>
    %116 = vector.shape_cast %113 : vector<4x1xf32> to vector<1x1x4x1xf32>
    tpu.vector_store %arg5[%c0_53, %c0_54, %c0_55, %c0_56], %116 {strides = array<i32>} : memref<1x1x4x1xf32, #tpu.memory_space<vmem>>, vector<1x1x4x1xf32>,
    %c0_57 = arith.constant 0 : index
    %c0_58 = arith.constant 0 : index
    %c0_59 = arith.constant 0 : index
    %c0_60 = arith.constant 0 : index
    %117 = vector.load %arg6[%c0_57, %c0_58, %c0_59, %c0_60] : memref<1x1x4x1xf32, #tpu.memory_space<vmem>>, vector<1x1x4x1xf32>
    %118 = vector.shape_cast %117 : vector<1x1x4x1xf32> to vector<4x1xf32>
    %119 = tpu.concatenate %53, %70, %87, %104 in 0 : vector<1x1xf32>, vector<1x1xf32>, vector<1x1xf32>, vector<1x1xf32> -> vector<4x1xf32>
    %120 = arith.addf %118, %119 : vector<4x1xf32>
    %c0_61 = arith.constant 0 : index
    %c0_62 = arith.constant 0 : index
    %c0_63 = arith.constant 0 : index
    %c0_64 = arith.constant 0 : index
    %121 = vector.load %arg6[%c0_61, %c0_62, %c0_63, %c0_64] : memref<1x1x4x1xf32, #tpu.memory_space<vmem>>, vector<1x1x4x1xf32>
    %122 = vector.shape_cast %121 : vector<1x1x4x1xf32> to vector<4x1xf32>
    %123 = vector.shape_cast %120 : vector<4x1xf32> to vector<1x1x4x1xf32>
    tpu.vector_store %arg6[%c0_61, %c0_62, %c0_63, %c0_64], %123 {strides = array<i32>} : memref<1x1x4x1xf32, #tpu.memory_space<vmem>>, vector<1x1x4x1xf32>,
    %c0_65 = arith.constant 0 : index
    %c0_66 = arith.constant 0 : index
    %c0_67 = arith.constant 0 : index
    %c0_68 = arith.constant 0 : index
    %124 = vector.load %arg7[%c0_65, %c0_66, %c0_67, %c0_68] : memref<1x1x4x1xf32, #tpu.memory_space<vmem>>, vector<1x1x4x1xf32>
    %125 = vector.shape_cast %124 : vector<1x1x4x1xf32> to vector<4x1xf32>
    %126 = tpu.concatenate %58, %75, %92, %109 in 0 : vector<1x1xf32>, vector<1x1xf32>, vector<1x1xf32>, vector<1x1xf32> -> vector<4x1xf32>
    %127 = arith.addf %125, %126 : vector<4x1xf32>
    %c0_69 = arith.constant 0 : index
    %c0_70 = arith.constant 0 : index
    %c0_71 = arith.constant 0 : index
    %c0_72 = arith.constant 0 : index
    %128 = vector.load %arg7[%c0_69, %c0_70, %c0_71, %c0_72] : memref<1x1x4x1xf32, #tpu.memory_space<vmem>>, vector<1x1x4x1xf32>
    %129 = vector.shape_cast %128 : vector<1x1x4x1xf32> to vector<4x1xf32>
    %130 = vector.shape_cast %127 : vector<4x1xf32> to vector<1x1x4x1xf32>
    tpu.vector_store %arg7[%c0_69, %c0_70, %c0_71, %c0_72], %130 {strides = array<i32>} : memref<1x1x4x1xf32, #tpu.memory_space<vmem>>, vector<1x1x4x1xf32>,
    return
  }
  func.func @transform_0(%arg0: i32, %arg1: i32, %arg2: i32) -> (i32, i32, i32, i32) {
    %c1_i32 = arith.constant 1 : i32
    %0 = arith.muli %arg1, %c1_i32 : i32
    %1 = arith.addi %0, %arg2 : i32
    %c0_i32 = arith.constant 0 : i32
    %c0_i32_0 = arith.constant 0 : i32
    %c0_i32_1 = arith.constant 0 : i32
    return %arg0, %c0_i32, %1, %c0_i32_0 : i32, i32, i32, i32
  }
  func.func @transform_1(%arg0: i32, %arg1: i32, %arg2: i32) -> (i32, i32, i32, i32) {
    %c1_i32 = arith.constant 1 : i32
    %0 = arith.muli %arg1, %c1_i32 : i32
    %1 = arith.addi %0, %arg2 : i32
    %c0_i32 = arith.constant 0 : i32
    %c0_i32_0 = arith.constant 0 : i32
    %c0_i32_1 = arith.constant 0 : i32
    return %arg0, %c0_i32, %1, %c0_i32_0 : i32, i32, i32, i32
  }
  func.func @transform_2(%arg0: i32, %arg1: i32, %arg2: i32) -> (i32, i32, i32, i32) {
    %c0_i32 = arith.constant 0 : i32
    %c0_i32_0 = arith.constant 0 : i32
    %c0_i32_1 = arith.constant 0 : i32
    return %arg0, %arg1, %c0_i32, %c0_i32_0 : i32, i32, i32, i32
  }
  func.func @transform_3(%arg0: i32, %arg1: i32, %arg2: i32) -> (i32, i32, i32, i32) {
    %c0_i32 = arith.constant 0 : i32
    %c0_i32_0 = arith.constant 0 : i32
    %c0_i32_1 = arith.constant 0 : i32
    return %arg0, %arg1, %c0_i32, %c0_i32_0 : i32, i32, i32, i32
  }
  func.func @transform_4(%arg0: i32, %arg1: i32, %arg2: i32) -> (i32, i32, i32, i32) {
    %c0_i32 = arith.constant 0 : i32
    %c0_i32_0 = arith.constant 0 : i32
    %c0_i32_1 = arith.constant 0 : i32
    return %arg0, %arg1, %c0_i32, %c0_i32_0 : i32, i32, i32, i32
  }
}

</mosaic_0001>

<llo_original>
// kernel: tpu_custom_call.1
$region0: #{tpu_custom_call.1}
  #allocation0 [shape = 'u32[]', space=smem, size = 0x4, offset = 0x4, fixed_abs, tag = 'smem constant byte address 0x4 - core index']
  #allocation1 [shape = 'u32[144,128]{1,0:T(1,128)}', space=vmem, size = 0x12000, scoped, tag = 'internal scratch']
  %s0 = inlined_call_operand.hbm [shape: f32[2,4,2,128], index: 0, kind: input, shape index: {}]
  %s1 = inlined_call_operand.hbm [shape: s32[2,1,2,128], index: 1, kind: input, shape index: {}]
  %s2 = inlined_call_operand.vmem [shape: f32[2,1,4,1], index: 2, kind: output, shape index: {0}]
  %s3 = inlined_call_operand.vmem [shape: f32[2,1,4,1], index: 3, kind: output, shape index: {1}]
  %s4 = inlined_call_operand.vmem [shape: f32[2,1,4,1], index: 4, kind: output, shape index: {2}]
  %5 = xla_tuple %s2, %s3, %s4
  %s6 = sld [smem:[#allocation0]]
  $region69: #{tpu_custom_call.1} parent=0
    _
  %s8 = ssub.s32 1, %s6
  %s9 = scalar_select 0, %s8, %s6
  $region1: #{tpu_custom_call.1} parent=0
    #allocation2 [shape = 'u8[8192]{0}', space=vmem, size = 0x2000, scoped, tag = 'input window, operand 0']
    #allocation3 [shape = 's32[2]{0}', space=sflag, size = 0x8, scoped, tag = 'scoped memory for tpu_custom_call.1']
    #allocation4 [shape = 'u8[2048]{0}', space=vmem, size = 0x800, scoped, tag = 'input window, operand 1']
    #allocation5 [shape = 's32[2]{0}', space=sflag, size = 0x8, scoped, tag = 'scoped memory for tpu_custom_call.1']
    %10 = vsyncpa [#allocation3], 0
    %s11 = scalar_lea.sflag [#allocation3], 1
    %12 = vsyncpa %s11, 0
    %13 = vsyncpa [#allocation5], 0
    %s14 = scalar_lea.sflag [#allocation5], 1
    %15 = vsyncpa %s14, 0
    loop: start=0, step=1, limit=4
    $region2: #{tpu_custom_call.1} parent=1 // loop_pre_header
      _
    $region3: #{tpu_custom_call.1} parent=1 // loop_header
      %s17 = sphi 0, %s21
      %p18 = scmp.ge.s32.totalorder %s17, 4
      %s24 = sphi 0, %s43
      %s25 = sphi 0, %s39
      %s26 = sphi 0, %s35
      %s27 = sphi 0, %s24
      %s28 = sphi 0, %s25
      %s29 = sphi 0, %s26
      %s30 = sphi 0, %s27
      %s31 = sphi 0, %s28
      %s32 = sphi 0, %s29
      %s50 = sphi 0, %s52
      %s53 = sphi 0, %s50
      %s54 = sphi 0, %s53
      %s70 = sphi 0, %s54
      %s80 = sphi 0, %s82
      %s83 = sphi 0, %s80
      %s84 = sphi 0, %s83
      %s100 = sphi 0, %s84
      %s108 = sphi 0, %s110
      %s111 = sphi 0, %s108
      %s112 = sphi 0, %s111
      %s128 = sphi 0, %s112
      %s136 = sphi 0, %s138
      %s139 = sphi 0, %s136
      %s140 = sphi 0, %s139
      %s156 = sphi 0, %s140
      %s164 = sphi 0, %s166
      %s167 = sphi 0, %s164
      %s168 = sphi 0, %s167
      %s184 = sphi 0, %s168
    $region4: #{tpu_custom_call.1} parent=1 // loop_header_branch
      %20 = sbr.rel (%p18) target = $region8
    $region5: #{tpu_custom_call.1} parent=1 // loop_body
      %s22 = ssub.s32 %s17, 1
      %s23 = ssub.s32 %s17, 2
      %s33 = sadd.s32 1, %s26
      %p34 = scmp.ge.s32.totalorder %s33, 1
      %s35 = scalar_select %p34, 0, %s33
      %s36 = sadd.s32 1, %s25
      %s37 = scalar_select %p34, %s36, %s25
      %p38 = scmp.ge.s32.totalorder %s37, 1
      %s39 = scalar_select %p38, 0, %s37
      %s40 = sadd.s32 1, %s24
      %s41 = scalar_select %p38, %s40, %s24
      %p42 = scmp.ge.s32.totalorder %s41, 2
      %s43 = scalar_select %p42, 0, %s41
      %s44 = sadd.s32 %s25, %s26
      %s45 = sadd.s32 %s39, %s35
      %s46 = ssub.s32 %s24, %s43
      %s47 = ssub.s32 %s44, %s45
      %s48 = sor.u32 %s46, %s47
      %p49 = scmp.eq.s32.totalorder %s48, 0
      %s51 = sadd.s32 %s50, 1
      %s52 = scalar_select %p49, %s50, %s51
      %p55 = pneg %p49
      %p56 = scmp.eq.s32.totalorder %s17, 1
      %p57 = por %p55, %p56
      %p58 = scmp.ne.s32.totalorder %s50, %s53
      %p59 = scmp.eq.s32.totalorder %s17, 0
      %p60 = por %p58, %p59
      %p61 = scmp.ne.s32.totalorder %s50, %s53
      %p62 = scmp.eq.s32.totalorder %s22, 1
      %p63 = por %p61, %p62
      %p64 = scmp.ne.s32.totalorder %s53, %s54
      %p65 = scmp.eq.s32.totalorder %s22, 0
      %p66 = por %p64, %p65
      %p67 = scmp.ne.s32.totalorder %s53, %s54
      %p68 = scmp.eq.s32.totalorder %s23, 1
      %p69 = por %p67, %p68
      %p71 = scmp.ne.s32.totalorder %s54, %s70
      %p72 = scmp.eq.s32.totalorder %s23, 0
      %p73 = por %p71, %p72
      %s74 = sadd.s32 %s25, %s26
      %s75 = sadd.s32 %s39, %s35
      %s76 = ssub.s32 %s24, %s43
      %s77 = ssub.s32 %s74, %s75
      %s78 = sor.u32 %s76, %s77
      %p79 = scmp.eq.s32.totalorder %s78, 0
      %s81 = sadd.s32 %s80, 1
      %s82 = scalar_select %p79, %s80, %s81
      %p85 = pneg %p79
      %p86 = scmp.eq.s32.totalorder %s17, 1
      %p87 = por %p85, %p86
      %p88 = scmp.ne.s32.totalorder %s80, %s83
      %p89 = scmp.eq.s32.totalorder %s17, 0
      %p90 = por %p88, %p89
      %p91 = scmp.ne.s32.totalorder %s80, %s83
      %p92 = scmp.eq.s32.totalorder %s22, 1
      %p93 = por %p91, %p92
      %p94 = scmp.ne.s32.totalorder %s83, %s84
      %p95 = scmp.eq.s32.totalorder %s22, 0
      %p96 = por %p94, %p95
      %p97 = scmp.ne.s32.totalorder %s83, %s84
      %p98 = scmp.eq.s32.totalorder %s23, 1
      %p99 = por %p97, %p98
      %p101 = scmp.ne.s32.totalorder %s84, %s100
      %p102 = scmp.eq.s32.totalorder %s23, 0
      %p103 = por %p101, %p102
      %s104 = ssub.s32 %s24, %s43
      %s105 = ssub.s32 %s25, %s39
      %s106 = sor.u32 %s104, %s105
      %p107 = scmp.eq.s32.totalorder %s106, 0
      %s109 = sadd.s32 %s108, 1
      %s110 = scalar_select %p107, %s108, %s109
      %p113 = pneg %p107
      %p114 = scmp.eq.s32.totalorder %s17, 1
      %p115 = por %p113, %p114
      %p116 = scmp.ne.s32.totalorder %s108, %s111
      %p117 = scmp.eq.s32.totalorder %s17, 0
      %p118 = por %p116, %p117
      %p119 = scmp.ne.s32.totalorder %s108, %s111
      %p120 = scmp.eq.s32.totalorder %s22, 1
      %p121 = por %p119, %p120
      %p122 = scmp.ne.s32.totalorder %s111, %s112
      %p123 = scmp.eq.s32.totalorder %s22, 0
      %p124 = por %p122, %p123
      %p125 = scmp.ne.s32.totalorder %s111, %s112
      %p126 = scmp.eq.s32.totalorder %s23, 1
      %p127 = por %p125, %p126
      %p129 = scmp.ne.s32.totalorder %s112, %s128
      %p130 = scmp.eq.s32.totalorder %s23, 0
      %p131 = por %p129, %p130
      %s132 = ssub.s32 %s24, %s43
      %s133 = ssub.s32 %s25, %s39
      %s134 = sor.u32 %s132, %s133
      %p135 = scmp.eq.s32.totalorder %s134, 0
      %s137 = sadd.s32 %s136, 1
      %s138 = scalar_select %p135, %s136, %s137
      %p141 = pneg %p135
      %p142 = scmp.eq.s32.totalorder %s17, 1
      %p143 = por %p141, %p142
      %p144 = scmp.ne.s32.totalorder %s136, %s139
      %p145 = scmp.eq.s32.totalorder %s17, 0
      %p146 = por %p144, %p145
      %p147 = scmp.ne.s32.totalorder %s136, %s139
      %p148 = scmp.eq.s32.totalorder %s22, 1
      %p149 = por %p147, %p148
      %p150 = scmp.ne.s32.totalorder %s139, %s140
      %p151 = scmp.eq.s32.totalorder %s22, 0
      %p152 = por %p150, %p151
      %p153 = scmp.ne.s32.totalorder %s139, %s140
      %p154 = scmp.eq.s32.totalorder %s23, 1
      %p155 = por %p153, %p154
      %p157 = scmp.ne.s32.totalorder %s140, %s156
      %p158 = scmp.eq.s32.totalorder %s23, 0
      %p159 = por %p157, %p158
      %s160 = ssub.s32 %s24, %s43
      %s161 = ssub.s32 %s25, %s39
      %s162 = sor.u32 %s160, %s161
      %p163 = scmp.eq.s32.totalorder %s162, 0
      %s165 = sadd.s32 %s164, 1
      %s166 = scalar_select %p163, %s164, %s165
      %p169 = pneg %p163
      %p170 = scmp.eq.s32.totalorder %s17, 1
      %p171 = por %p169, %p170
      %p172 = scmp.ne.s32.totalorder %s164, %s167
      %p173 = scmp.eq.s32.totalorder %s17, 0
      %p174 = por %p172, %p173
      %p175 = scmp.ne.s32.totalorder %s164, %s167
      %p176 = scmp.eq.s32.totalorder %s22, 1
      %p177 = por %p175, %p176
      %p178 = scmp.ne.s32.totalorder %s167, %s168
      %p179 = scmp.eq.s32.totalorder %s22, 0
      %p180 = por %p178, %p179
      %p181 = scmp.ne.s32.totalorder %s167, %s168
      %p182 = scmp.eq.s32.totalorder %s23, 1
      %p183 = por %p181, %p182
      %p185 = scmp.ne.s32.totalorder %s168, %s184
      %p186 = scmp.eq.s32.totalorder %s23, 0
      %p187 = por %p185, %p186
      %p188 = scmp.le.s32.totalorder 1, %s17
      %p189 = scmp.lt.s32.totalorder %s17, 3
      %p190 = pnand %p188, %p189
      %p191 = pneg %p190
      // Predicated region
      $region9: #{tpu_custom_call.1} parent=5 // pred_check
        _
      $region10: #{tpu_custom_call.1} parent=5 // pred_check_branch
        %193 = sbr.rel (%p190) target = $region12
      $region11: #{tpu_custom_call.1} parent=5 // pred_region
        %s194 = ssub.s32 %s17, 1
      $region12: #{tpu_custom_call.1} parent=5 // pred_fallthru
        _
      %p195 = scmp.lt.s32.totalorder %s17, 2
      // Predicated region
      $region13: #{tpu_custom_call.1} parent=5 // pred_check
        %p196 = pneg %p195
      $region14: #{tpu_custom_call.1} parent=5 // pred_check_branch
        %198 = sbr.rel (%p196) target = $region16
      $region15: #{tpu_custom_call.1} parent=5 // pred_region
        // Predicated region
        $region17: #{tpu_custom_call.1} parent=15 // pred_check
          %p199 = pneg %p60
        $region18: #{tpu_custom_call.1} parent=15 // pred_check_branch
          %201 = sbr.rel (%p199) target = $region20
        $region19: #{tpu_custom_call.1} parent=15 // pred_region
          %s202 = sand.u32 %s50, 1
          %s203 = scalar_lea.sflag [#allocation3], %s202
          %s204 = sand.u32 %s50, 1
          %s205 = smul.addr %s204, 8
          %s206 = scalar_lea.vmem [#allocation2], %s205
          %s207 = sadd.s32 %s25, %s26
          %s209 = ssub.s32 128, 128
          %210 = vsyncadd %s203, %s209
          %s211 = smul.addr %s24, 4
          %s212 = sadd.s32 %s207, %s211
          %s213 = smul.addr %s212, 32
          %s214 = scalar_lea.hbm %s0, %s213
          %s215 = sshll.u32 %s206, 4
          %s216 = int_to_ptr.vmem [resolvable:$true] %s215
          %221 = dma.hbm_to_vmem [thread:$0]  %s214, 128, %s216, %s203, 32, 32, 2
        $region20: #{tpu_custom_call.1} parent=15 // pred_fallthru
          _
        // Predicated region
        $region21: #{tpu_custom_call.1} parent=15 // pred_check
          %p222 = pneg %p90
        $region22: #{tpu_custom_call.1} parent=15 // pred_check_branch
          %224 = sbr.rel (%p222) target = $region24
        $region23: #{tpu_custom_call.1} parent=15 // pred_region
          %s225 = sand.u32 %s80, 1
          %s226 = scalar_lea.sflag [#allocation5], %s225
          %s227 = sand.u32 %s80, 1
          %s228 = smul.addr %s227, 2
          %s229 = scalar_lea.vmem [#allocation4], %s228
          %s230 = sadd.s32 %s25, %s26
          %s232 = ssub.s32 32, 32
          %233 = vsyncadd %s226, %s232
          %s234 = sadd.s32 %s230, %s24
          %s235 = smul.addr %s234, 32
          %s236 = scalar_lea.hbm %s1, %s235
          %s238 = sshll.u32 %s229, 4
          %s239 = int_to_ptr.vmem [resolvable:$true] %s238
          %241 = dma.hbm_to_vmem [thread:$0]  %s236, 32, %s239, %s226
        $region24: #{tpu_custom_call.1} parent=15 // pred_fallthru
          _
      $region16: #{tpu_custom_call.1} parent=5 // pred_fallthru
        _
      %p242 = scmp.le.s32.totalorder 1, %s17
      %p243 = scmp.lt.s32.totalorder %s17, 3
      %p244 = pnand %p242, %p243
      %p245 = pneg %p244
      // Predicated region
      $region25: #{tpu_custom_call.1} parent=5 // pred_check
        _
      $region26: #{tpu_custom_call.1} parent=5 // pred_check_branch
        %247 = sbr.rel (%p244) target = $region28
      $region27: #{tpu_custom_call.1} parent=5 // pred_region
        %s248 = ssub.s32 %s17, 1
        %s249 = sand.u32 %s53, 1
        %s250 = scalar_lea.sflag [#allocation3], %s249
        %s251 = sand.u32 %s53, 1
        %s252 = smul.addr %s251, 8
        %s253 = scalar_lea.vmem [#allocation2], %s252
        // Predicated region
        $region29: #{tpu_custom_call.1} parent=27 // pred_check
          %p254 = pneg %p66
        $region30: #{tpu_custom_call.1} parent=27 // pred_check_branch
          %256 = sbr.rel (%p254) target = $region32
        $region31: #{tpu_custom_call.1} parent=27 // pred_region
          %257 = dma.done %s250, 128
        $region32: #{tpu_custom_call.1} parent=27 // pred_fallthru
          _
        %s258 = sand.u32 %s83, 1
        %s259 = scalar_lea.sflag [#allocation5], %s258
        %s260 = sand.u32 %s83, 1
        %s261 = smul.addr %s260, 2
        %s262 = scalar_lea.vmem [#allocation4], %s261
        // Predicated region
        $region33: #{tpu_custom_call.1} parent=27 // pred_check
          %p263 = pneg %p96
        $region34: #{tpu_custom_call.1} parent=27 // pred_check_branch
          %265 = sbr.rel (%p263) target = $region36
        $region35: #{tpu_custom_call.1} parent=27 // pred_region
          %266 = dma.done %s259, 32
        $region36: #{tpu_custom_call.1} parent=27 // pred_fallthru
          _
        %s267 = sand.u32 %s53, 1
        %s268 = scalar_lea.sflag [#allocation3], %s267
        %s269 = sand.u32 %s53, 1
        %s270 = smul.addr %s269, 8
        %s271 = scalar_lea.vmem [#allocation2], %s270
        %p272 = pneg %p66
        %p273 = pneg %p63
        %s274 = sand.u32 %s83, 1
        %s275 = scalar_lea.sflag [#allocation5], %s274
        %s276 = sand.u32 %s83, 1
        %s277 = smul.addr %s276, 2
        %s278 = scalar_lea.vmem [#allocation4], %s277
        %p279 = pneg %p96
        %p280 = pneg %p93
        %p281 = pneg %p124
        %p282 = pneg %p121
        %p283 = scmp.lt.s32.totalorder %s27, 1
        %s284 = scalar_select %p283, %s27, 1
        %p285 = scmp.lt.s32.totalorder %s28, 0
        %s286 = scalar_select %p285, %s28, 0
        %s287 = sadd.s32 %s286, %s284
        %s288 = smul.addr %s287, 4
        %s289 = scalar_lea.vmem %s2, %s288
        %p290 = pneg %p152
        %p291 = pneg %p149
        %p292 = scmp.lt.s32.totalorder %s27, 1
        %s293 = scalar_select %p292, %s27, 1
        %p294 = scmp.lt.s32.totalorder %s28, 0
        %s295 = scalar_select %p294, %s28, 0
        %s296 = sadd.s32 %s295, %s293
        %s297 = smul.addr %s296, 4
        %s298 = scalar_lea.vmem %s3, %s297
        %p299 = pneg %p180
        %p300 = pneg %p177
        %p301 = scmp.lt.s32.totalorder %s27, 1
        %s302 = scalar_select %p301, %s27, 1
        %p303 = scmp.lt.s32.totalorder %s28, 0
        %s304 = scalar_select %p303, %s28, 0
        %s305 = sadd.s32 %s304, %s302
        %s306 = smul.addr %s305, 4
        %s307 = scalar_lea.vmem %s4, %s306
        %s308 = sadd.s32 %s28, %s29
        %s309 = sadd.s32 %s28, %s29
        %p310 = scmp.lt.s32.totalorder %s27, 1
        %s311 = scalar_select %p310, %s27, 1
        %p312 = scmp.lt.s32.totalorder %s28, 0
        %s313 = scalar_select %p312, %s28, 0
        %s314 = sadd.s32 %s313, %s311
        %s315 = smul.addr %s314, 4
        %s316 = scalar_lea.vmem %s2, %s315
        %p317 = scmp.lt.s32.totalorder %s27, 1
        %s318 = scalar_select %p317, %s27, 1
        %p319 = scmp.lt.s32.totalorder %s28, 0
        %s320 = scalar_select %p319, %s28, 0
        %s321 = sadd.s32 %s320, %s318
        %s322 = smul.addr %s321, 4
        %s323 = scalar_lea.vmem %s3, %s322
        %p324 = scmp.lt.s32.totalorder %s27, 1
        %s325 = scalar_select %p324, %s27, 1
        %p326 = scmp.lt.s32.totalorder %s28, 0
        %s327 = scalar_select %p326, %s28, 0
        %s328 = sadd.s32 %s327, %s325
        %s329 = smul.addr %s328, 4
        %s330 = scalar_lea.vmem %s4, %s329
        %p331 = scmp.eq.s32.totalorder %s29, 0
        // Predicated region
        $region37: #{tpu_custom_call.1} parent=27 // pred_check
          %p332 = pneg %p331
        $region38: #{tpu_custom_call.1} parent=27 // pred_check_branch
          %334 = sbr.rel (%p332) target = $region40
        $region39: #{tpu_custom_call.1} parent=27 // pred_region
          %vm335 = vcmask 3072
          %336 = vst.msk [vmem:[%s316] sm:$0xf] %vm335, 0.0
          %337 = vst.msk [vmem:[%s323] sm:$0xf] %vm335, 0.0
          %338 = vst.msk [vmem:[%s330] sm:$0xf] %vm335, 0.0
        $region40: #{tpu_custom_call.1} parent=27 // pred_fallthru
          _
        %v339 = vld [vmem:[%s262] sm:$0x3]
        %vm340 = vcmp.ge.s32.totalorder %v339, 0
        %v341 = vld [vmem:[%s253] sm:$0x3]
        %v342 = vsel %vm340, %v341, 0.0
        %s343 = scalar_lea.vmem %s253, 2 [#allocation2]
        %v344 = vld [vmem:[%s343] sm:$0x3]
        %v345 = vsel %vm340, %v344, 0.0
        %s346 = scalar_lea.vmem %s253, 4 [#allocation2]
        %v347 = vld [vmem:[%s346] sm:$0x3]
        %v348 = vsel %vm340, %v347, 0.0
        %s349 = scalar_lea.vmem %s253, 6 [#allocation2]
        %v350 = vld [vmem:[%s349] sm:$0x3]
        %v351 = vsel %vm340, %v350, 0.0
        %v352 = vmax.f32 %v342, %v345
        %v353 = vmax.f32 %v352, %v348
        %v354 = vmax.f32 %v353, %v351
        %v355 = vsub.f32 %v342, %v354
        %v356 = vmul.f32 %v355, 1.442695
        %v357 = vpow.pop %v356
        %v358 = vsub.f32 %v345, %v354
        %v359 = vmul.f32 %v358, 1.442695
        %v360 = vpow.pop %v359
        %v361 = vsub.f32 %v348, %v354
        %v362 = vmul.f32 %v361, 1.442695
        %v363 = vpow.pop %v362
        %v364 = vsub.f32 %v351, %v354
        %v365 = vmul.f32 %v364, 1.442695
        %v366 = vpow.pop %v365
        %v367 = vadd.f32 %v357, %v360
        %v368 = vadd.f32 %v367, %v363
        %v369 = vadd.f32 %v368, %v366
        %v370 = vrcp.pop %v369
        %v371 = vsel %vm340, %v370, 0.0
        %v372 = vmul.f32 %v357, %v371
        %vm373 = vcmp.eq.s32.totalorder %v339, 0
        %vm374 = vcmask 1041408
        %v375 = vsel %vm374, %v372, 0.0
        %v376 = vrot.slane %v375, 4
        %v377 = vadd.f32 %v375, %v376
        %v378 = vrot.slane %v377, 2
        %v379 = vadd.f32 %v377, %v378
        %v380 = vrot.slane %v379, 1
        %v381 = vadd.f32 %v379, %v380
        %382 = vadd.xlane.f32.xlu0 %v381
        %v383 = vpop.xlane.xlu0 %382
        %v384 = vsel %vm373, %v372, 0.0
        %v385 = vsel %vm374, %v384, 0.0
        %v386 = vrot.slane %v385, 4
        %v387 = vadd.f32 %v385, %v386
        %v388 = vrot.slane %v387, 2
        %v389 = vadd.f32 %v387, %v388
        %v390 = vrot.slane %v389, 1
        %v391 = vadd.f32 %v389, %v390
        %392 = vadd.xlane.f32.xlu0 %v391
        %v393 = vpop.xlane.xlu0 %392
        %v394 = vsel %vm373, 1.0, 0.0
        %v395 = vsel %vm374, %v394, 0.0
        %v396 = vrot.slane %v395, 4
        %v397 = vadd.f32 %v395, %v396
        %v398 = vrot.slane %v397, 2
        %v399 = vadd.f32 %v397, %v398
        %v400 = vrot.slane %v399, 1
        %v401 = vadd.f32 %v399, %v400
        %402 = vadd.xlane.f32.xlu0 %v401
        %v403 = vpop.xlane.xlu0 %402
        %v404 = vmul.f32 %v360, %v371
        %vm405 = vcmp.eq.s32.totalorder %v339, 1
        %v406 = vsel %vm374, %v404, 0.0
        %v407 = vrot.slane %v406, 4
        %v408 = vadd.f32 %v406, %v407
        %v409 = vrot.slane %v408, 2
        %v410 = vadd.f32 %v408, %v409
        %v411 = vrot.slane %v410, 1
        %v412 = vadd.f32 %v410, %v411
        %413 = vadd.xlane.f32.xlu0 %v412
        %v414 = vpop.xlane.xlu0 %413
        %v415 = vsel %vm405, %v404, 0.0
        %v416 = vsel %vm374, %v415, 0.0
        %v417 = vrot.slane %v416, 4
        %v418 = vadd.f32 %v416, %v417
        %v419 = vrot.slane %v418, 2
        %v420 = vadd.f32 %v418, %v419
        %v421 = vrot.slane %v420, 1
        %v422 = vadd.f32 %v420, %v421
        %423 = vadd.xlane.f32.xlu0 %v422
        %v424 = vpop.xlane.xlu0 %423
        %v425 = vsel %vm405, 1.0, 0.0
        %v426 = vsel %vm374, %v425, 0.0
        %v427 = vrot.slane %v426, 4
        %v428 = vadd.f32 %v426, %v427
        %v429 = vrot.slane %v428, 2
        %v430 = vadd.f32 %v428, %v429
        %v431 = vrot.slane %v430, 1
        %v432 = vadd.f32 %v430, %v431
        %433 = vadd.xlane.f32.xlu0 %v432
        %v434 = vpop.xlane.xlu0 %433
        %v435 = vmul.f32 %v363, %v371
        %vm436 = vcmp.eq.s32.totalorder %v339, 2
        %v437 = vsel %vm374, %v435, 0.0
        %v438 = vrot.slane %v437, 4
        %v439 = vadd.f32 %v437, %v438
        %v440 = vrot.slane %v439, 2
        %v441 = vadd.f32 %v439, %v440
        %v442 = vrot.slane %v441, 1
        %v443 = vadd.f32 %v441, %v442
        %444 = vadd.xlane.f32.xlu0 %v443
        %v445 = vpop.xlane.xlu0 %444
        %v446 = vsel %vm436, %v435, 0.0
        %v447 = vsel %vm374, %v446, 0.0
        %v448 = vrot.slane %v447, 4
        %v449 = vadd.f32 %v447, %v448
        %v450 = vrot.slane %v449, 2
        %v451 = vadd.f32 %v449, %v450
        %v452 = vrot.slane %v451, 1
        %v453 = vadd.f32 %v451, %v452
        %454 = vadd.xlane.f32.xlu0 %v453
        %v455 = vpop.xlane.xlu0 %454
        %v456 = vsel %vm436, 1.0, 0.0
        %v457 = vsel %vm374, %v456, 0.0
        %v458 = vrot.slane %v457, 4
        %v459 = vadd.f32 %v457, %v458
        %v460 = vrot.slane %v459, 2
        %v461 = vadd.f32 %v459, %v460
        %v462 = vrot.slane %v461, 1
        %v463 = vadd.f32 %v461, %v462
        %464 = vadd.xlane.f32.xlu0 %v463
        %v465 = vpop.xlane.xlu0 %464
        %v466 = vmul.f32 %v366, %v371
        %vm467 = vcmp.eq.s32.totalorder %v339, 3
        %v468 = vsel %vm374, %v466, 0.0
        %v469 = vrot.slane %v468, 4
        %v470 = vadd.f32 %v468, %v469
        %v471 = vrot.slane %v470, 2
        %v472 = vadd.f32 %v470, %v471
        %v473 = vrot.slane %v472, 1
        %v474 = vadd.f32 %v472, %v473
        %475 = vadd.xlane.f32.xlu0 %v474
        %v476 = vpop.xlane.xlu0 %475
        %v477 = vsel %vm467, %v466, 0.0
        %v478 = vsel %vm374, %v477, 0.0
        %v479 = vrot.slane %v478, 4
        %v480 = vadd.f32 %v478, %v479
        %v481 = vrot.slane %v480, 2
        %v482 = vadd.f32 %v480, %v481
        %v483 = vrot.slane %v482, 1
        %v484 = vadd.f32 %v482, %v483
        %485 = vadd.xlane.f32.xlu0 %v484
        %v486 = vpop.xlane.xlu0 %485
        %v487 = vsel %vm467, 1.0, 0.0
        %v488 = vsel %vm374, %v487, 0.0
        %v489 = vrot.slane %v488, 4
        %v490 = vadd.f32 %v488, %v489
        %v491 = vrot.slane %v490, 2
        %v492 = vadd.f32 %v490, %v491
        %v493 = vrot.slane %v492, 1
        %v494 = vadd.f32 %v492, %v493
        %495 = vadd.xlane.f32.xlu0 %v494
        %v496 = vpop.xlane.xlu0 %495
        %v497 = vld [vmem:[%s316] sm:$0xf]
        %vm498 = vcmask 1040384
        %v499 = vsel %vm498, %v383, %v414
        %v500 = vsel %vm374, %v499, %v445
        %vm501 = vcmask 1042432
        %v502 = vsel %vm501, %v500, %v476
        %v503 = vadd.f32 %v497, %v502
        %vm504 = vcmask 3072
        %505 = vst.msk [vmem:[%s316] sm:$0xf] %vm504, %v503
        %v506 = vld [vmem:[%s323] sm:$0xf]
        %v507 = vsel %vm498, %v393, %v424
        %v508 = vsel %vm374, %v507, %v455
        %v509 = vsel %vm501, %v508, %v486
        %v510 = vadd.f32 %v506, %v509
        %511 = vst.msk [vmem:[%s323] sm:$0xf] %vm504, %v510
        %v512 = vld [vmem:[%s330] sm:$0xf]
        %v513 = vsel %vm498, %v403, %v434
        %v514 = vsel %vm374, %v513, %v465
        %v515 = vsel %vm501, %v514, %v496
        %v516 = vadd.f32 %v512, %v515
        %517 = vst.msk [vmem:[%s330] sm:$0xf] %vm504, %v516
        %p518 = scmp.lt.s32.totalorder %s27, 1
        %s519 = scalar_select %p518, %s27, 1
        %p520 = scmp.lt.s32.totalorder %s28, 0
        %s521 = scalar_select %p520, %s28, 0
        %s522 = sadd.s32 %s521, %s519
        %s523 = smul.addr %s522, 4
        %s524 = scalar_lea.vmem %s2, %s523
        %p525 = scmp.lt.s32.totalorder %s27, 1
        %s526 = scalar_select %p525, %s27, 1
        %p527 = scmp.lt.s32.totalorder %s28, 0
        %s528 = scalar_select %p527, %s28, 0
        %s529 = sadd.s32 %s528, %s526
        %s530 = smul.addr %s529, 4
        %s531 = scalar_lea.vmem %s3, %s530
        %p532 = scmp.lt.s32.totalorder %s27, 1
        %s533 = scalar_select %p532, %s27, 1
        %p534 = scmp.lt.s32.totalorder %s28, 0
        %s535 = scalar_select %p534, %s28, 0
        %s536 = sadd.s32 %s535, %s533
        %s537 = smul.addr %s536, 4
        %s538 = scalar_lea.vmem %s4, %s537
        // Predicated region
        $region41: #{tpu_custom_call.1} parent=27 // pred_check
          %p539 = pneg %p121
        $region42: #{tpu_custom_call.1} parent=27 // pred_check_branch
          %541 = sbr.rel (%p539) target = $region44
        $region43: #{tpu_custom_call.1} parent=27 // pred_region
          _
        $region44: #{tpu_custom_call.1} parent=27 // pred_fallthru
          _
        // Predicated region
        $region45: #{tpu_custom_call.1} parent=27 // pred_check
          %p542 = pneg %p149
        $region46: #{tpu_custom_call.1} parent=27 // pred_check_branch
          %544 = sbr.rel (%p542) target = $region48
        $region47: #{tpu_custom_call.1} parent=27 // pred_region
          _
        $region48: #{tpu_custom_call.1} parent=27 // pred_fallthru
          _
        // Predicated region
        $region49: #{tpu_custom_call.1} parent=27 // pred_check
          %p545 = pneg %p177
        $region50: #{tpu_custom_call.1} parent=27 // pred_check_branch
          %547 = sbr.rel (%p545) target = $region52
        $region51: #{tpu_custom_call.1} parent=27 // pred_region
          _
        $region52: #{tpu_custom_call.1} parent=27 // pred_fallthru
          _
      $region28: #{tpu_custom_call.1} parent=5 // pred_fallthru
        _
      %p548 = scmp.le.s32.totalorder 2, %s17
      // Predicated region
      $region53: #{tpu_custom_call.1} parent=5 // pred_check
        %p549 = pneg %p548
      $region54: #{tpu_custom_call.1} parent=5 // pred_check_branch
        %551 = sbr.rel (%p549) target = $region56
      $region55: #{tpu_custom_call.1} parent=5 // pred_region
        %s552 = ssub.s32 %s17, 2
        // Predicated region
        $region57: #{tpu_custom_call.1} parent=55 // pred_check
          %p553 = pneg %p127
        $region58: #{tpu_custom_call.1} parent=55 // pred_check_branch
          %555 = sbr.rel (%p553) target = $region60
        $region59: #{tpu_custom_call.1} parent=55 // pred_region
          %p556 = scmp.lt.s32.totalorder %s30, 1
          %s557 = scalar_select %p556, %s30, 1
          %p558 = scmp.lt.s32.totalorder %s31, 0
          %s559 = scalar_select %p558, %s31, 0
          %s560 = sadd.s32 %s559, %s557
          %s561 = smul.addr %s560, 4
          %s562 = scalar_lea.vmem %s2, %s561
        $region60: #{tpu_custom_call.1} parent=55 // pred_fallthru
          _
        // Predicated region
        $region61: #{tpu_custom_call.1} parent=55 // pred_check
          %p563 = pneg %p155
        $region62: #{tpu_custom_call.1} parent=55 // pred_check_branch
          %565 = sbr.rel (%p563) target = $region64
        $region63: #{tpu_custom_call.1} parent=55 // pred_region
          %p566 = scmp.lt.s32.totalorder %s30, 1
          %s567 = scalar_select %p566, %s30, 1
          %p568 = scmp.lt.s32.totalorder %s31, 0
          %s569 = scalar_select %p568, %s31, 0
          %s570 = sadd.s32 %s569, %s567
          %s571 = smul.addr %s570, 4
          %s572 = scalar_lea.vmem %s3, %s571
        $region64: #{tpu_custom_call.1} parent=55 // pred_fallthru
          _
        // Predicated region
        $region65: #{tpu_custom_call.1} parent=55 // pred_check
          %p573 = pneg %p183
        $region66: #{tpu_custom_call.1} parent=55 // pred_check_branch
          %575 = sbr.rel (%p573) target = $region68
        $region67: #{tpu_custom_call.1} parent=55 // pred_region
          %p576 = scmp.lt.s32.totalorder %s30, 1
          %s577 = scalar_select %p576, %s30, 1
          %p578 = scmp.lt.s32.totalorder %s31, 0
          %s579 = scalar_select %p578, %s31, 0
          %s580 = sadd.s32 %s579, %s577
          %s581 = smul.addr %s580, 4
          %s582 = scalar_lea.vmem %s4, %s581
        $region68: #{tpu_custom_call.1} parent=55 // pred_fallthru
          _
      $region56: #{tpu_custom_call.1} parent=5 // pred_fallthru
        _
    $region6: #{tpu_custom_call.1} parent=1 // loop_footer
      %s21 = sadd.s32 1, %s17
    $region7: #{tpu_custom_call.1} parent=1 // loop_footer_branch
      %16 = sbr.rel target = $region3
    $region8: #{tpu_custom_call.1} parent=1 // loop_exit
      _
    %583 = vsyncpa [#allocation3], 1
    %s584 = scalar_lea.sflag [#allocation3], 1
    %585 = vsyncpa %s584, 1
    %586 = vsyncpa [#allocation5], 1
    %s587 = scalar_lea.sflag [#allocation5], 1
    %588 = vsyncpa %s587, 1

</llo_original>
